<compile_context>
chip_gen: v6e
topology: v6e:2x2x1
jax: 0.10.0
libtpu: 0.0.40
codegen_flags: <defaults>
</compile_context>

<pallas_src>
import functools
import math

import jax
import jax.numpy as jnp
from jax import lax
from jax.experimental import pallas as pl
from jax.experimental.pallas import tpu as pltpu

_LOG2E = math.log2(math.e)
_MASK_FILL = -1.0e9                      # reference fill value (pre-log2e domain)


# --------------------------------------------------------------------------- #
# VMEM budgeting / tile selection
# --------------------------------------------------------------------------- #
def _vmem_limits():
    """Returns (vmem_limit_bytes for CompilerParams, tile-sizing budget)."""
    cap = 64 * 1024 * 1024               # conservative default (v7x physical VMEM)
    try:
        info = pltpu.get_tpu_info()
        cap = int(getattr(info, "vmem_capacity_bytes", cap) or cap)
    except Exception:
        pass
    limit = min((cap * 3) // 4, 100 * 1024 * 1024)   # ~48MiB on v7x, 96MiB on v5e/v6e
    budget = (limit * 3) // 5                        # headroom for compiler temps
    return limit, budget


def _choose_bq_attn(B, Lq, Lk, D, Dv, itemsize, mask_row_bytes, budget):
    """Largest 8-aligned q-block whose per-step VMEM footprint fits the budget."""
    if Lq <= 8:
        return Lq
    fixed = 2 * Lk * (D + Dv) * itemsize                   # double-buffered K^T + V
    avail = max(budget - fixed, 2 * 1024 * 1024)
    # per q-row: 2x attn tile (double-buffered writeback), per-row mask bytes,
    # ~3 live f32 copies of the (bq, Lk) softmax chain, q/out rows.
    per_row = Lk * (2 * itemsize + mask_row_bytes + 3 * 4) + 2 * (D + Dv) * itemsize
    bq = int(avail // per_row)
    bq = min(bq, 512, Lq)
    if bq >= Lq:
        bq = Lq
    else:
        bq = max((bq // 8) * 8, 8)
    # v7x: make sure both TensorCores get at least one grid step each.
    if B * pl.cdiv(Lq, bq) < 2 and Lq >= 16:
        bq = min(bq, (((Lq + 1) // 2 + 7) // 8) * 8)
    return bq


def _cost(B, Lq, Lk, D, Dv, q, k, v, mask_bytes, attn_bytes, out_bytes):
    flops = 2 * B * Lq * Lk * (D + Dv)
    trans = B * Lq * Lk
    bytes_accessed = (q.size * q.dtype.itemsize + k.size * k.dtype.itemsize +
                      v.size * v.dtype.itemsize + mask_bytes + attn_bytes + out_bytes)
    return pl.CostEstimate(flops=flops, transcendentals=trans,
                           bytes_accessed=bytes_accessed)


def _prepare_mask(mask, B, Lq, Lk):
    """Classify the mask: returns (mask_i8, is_key_mask, mask_batched)."""
    if mask is None:
        return None, False, False
    if mask.ndim == 2:                                   # (B|1, Lk) key padding
        m = mask.reshape(mask.shape[0], 1, mask.shape[1])
        is_key = True
    elif mask.ndim == 3 and mask.shape[1] == 1:          # (B|1, 1, Lk)
        m = mask
        is_key = True
    else:                                                # (B|1, Lq, Lk) dense
        assert mask.shape[-2:] == (Lq, Lk)
        m = mask
        is_key = False
    assert m.shape[-1] == Lk
    return m.astype(jnp.int8), is_key, (m.shape[0] != 1)


# --------------------------------------------------------------------------- #
# Kernel bodies
# --------------------------------------------------------------------------- #
def _qk_scores(q, kT, factor):
    """(bq, D) @ (D, Lk) -> f32 scores already carrying log2(e)[/sqrt(D)]."""
    q = q * jnp.asarray(factor, dtype=q.dtype)           # fold scale into q (bq*D mul)
    return jnp.dot(q, kT, preferred_element_type=jnp.float32)


def _softmax_pv(s, v, out_ref, attn_ref):
    """exp2 softmax over keys, then attn @ v; attn stored before the PV matmul."""
    s = s - jnp.max(s, axis=-1, keepdims=True)
    p = jnp.exp2(s)                                      # exp(x) via exp2(x*log2 e)
    denom = jnp.sum(p, axis=-1, keepdims=True)
    attn = (p * pl.reciprocal(denom, approx=False)).astype(attn_ref.dtype)
    attn_ref[...] = attn                                 # retire f32 chain before PV
    out = jnp.dot(attn.astype(v.dtype), v, preferred_element_type=jnp.float32)
    out_ref[...] = out.astype(out_ref.dtype)


def _sdpa_kernel(q_ref, kT_ref, v_ref, out_ref, attn_ref, *, factor):
    s = _qk_scores(q_ref[...], kT_ref[...], factor)
    _softmax_pv(s, v_ref[...], out_ref, attn_ref)


def _sdpa_mask_kernel(q_ref, kT_ref, v_ref, mask_ref, out_ref, attn_ref, *, factor):
    s = _qk_scores(q_ref[...], kT_ref[...], factor)
    # mask broadcast: (1, Lk) key-padding or (bq, Lk) dense, nonzero = masked.
    s = jnp.where(mask_ref[...] != 0, jnp.float32(_MASK_FILL * _LOG2E), s)
    _softmax_pv(s, v_ref[...], out_ref, attn_ref)


# ---- flash-style (no attn output) path ------------------------------------ #
def _maybe_kv_bound(s, bk, kv_len):
    """Mask padded key columns of the last kv block (static no-op if divisible)."""
    if kv_len % bk != 0:
        col = pl.program_id(2) * bk + lax.broadcasted_iota(jnp.int32, s.shape, 1)
        s = jnp.where(col < kv_len, s, jnp.float32(_MASK_FILL * _LOG2E))
    return s


def _flash_body(s, v_ref, out_ref, m_sc, l_sc, acc_sc):
    ki = pl.program_id(2)

    @pl.when(ki == 0)
    def _():
        m_sc[...] = jnp.full_like(m_sc, -jnp.inf)
        l_sc[...] = jnp.zeros_like(l_sc)
        acc_sc[...] = jnp.zeros_like(acc_sc)

    m_prev = m_sc[...]
    m_new = jnp.maximum(m_prev, jnp.max(s, axis=-1, keepdims=True))
    alpha = jnp.exp2(m_prev - m_new)
    p = jnp.exp2(s - m_new)
    l_sc[...] = alpha * l_sc[...] + jnp.sum(p, axis=-1, keepdims=True)
    acc_sc[...] = alpha * acc_sc[...] + jnp.dot(
        p.astype(v_ref.dtype), v_ref[...], preferred_element_type=jnp.float32)
    m_sc[...] = m_new

    @pl.when(ki == pl.num_programs(2) - 1)
    def _():
        out_ref[...] = (acc_sc[...] *
                        pl.reciprocal(l_sc[...], approx=False)).astype(out_ref.dtype)


def _flash_kernel(q_ref, kT_ref, v_ref, out_ref, m_sc, l_sc, acc_sc, *,
                  factor, bk, kv_len):
    s = _qk_scores(q_ref[...], kT_ref[...], factor)
    s = _maybe_kv_bound(s, bk, kv_len)
    _flash_body(s, v_ref, out_ref, m_sc, l_sc, acc_sc)


def _flash_mask_kernel(q_ref, kT_ref, v_ref, mask_ref, out_ref, m_sc, l_sc, acc_sc, *,
                       factor, bk, kv_len):
    s = _qk_scores(q_ref[...], kT_ref[...], factor)
    s = jnp.where(mask_ref[...] != 0, jnp.float32(_MASK_FILL * _LOG2E), s)
    s = _maybe_kv_bound(s, bk, kv_len)
    _flash_body(s, v_ref, out_ref, m_sc, l_sc, acc_sc)


# --------------------------------------------------------------------------- #
# Public wrapper
# --------------------------------------------------------------------------- #
def scaled_dot_product_attention(q, k, v, mask=None, *, scale=True, return_attn=True):
    """Pallas TPU implementation of ScaledDotProductAttention.forward (eval mode).

    q: [B, Lq, D], k: [B, Lk, D], v: [B, Lk, Dv]
    mask: optional bool/int array, True/nonzero = masked (-1e9). Accepted shapes:
      [B, Lq, Lk] (per-query-key), [B, 1, Lk] or [B, Lk] (key padding, broadcast
      in-kernel — no dense mask stream from HBM).
    Returns (output [B, Lq, Dv], attn [B, Lq, Lk]); attn is None when
    return_attn=False, in which case a kv-tiled online-softmax kernel is used
    (no attn writeback, no full-Lk VMEM residency requirement).
    """
    B, Lq, D = q.shape
    Bk, Lk, Dk = k.shape
    Bv, Lkv, Dv = v.shape
    assert Dk == D and Bk == B and Bv == B and Lkv == Lk

    factor = float(_LOG2E / math.sqrt(D)) if scale else float(_LOG2E)
    kT = jnp.swapaxes(k, 1, 2)                           # (B, D, Lk); cheap vs attn I/O
    mask_i8, is_key_mask, mask_batched = _prepare_mask(mask, B, Lq, Lk)

    vmem_limit, budget = _vmem_limits()
    itemsize = jnp.dtype(q.dtype).itemsize

    if return_attn:
        mask_row_bytes = 2 if (mask_i8 is not None and not is_key_mask) else 0
        bq = _choose_bq_attn(B, Lq, Lk, D, Dv, itemsize, mask_row_bytes, budget)
        nq = pl.cdiv(Lq, bq)
        grid = (B, nq)

        q_spec = pl.BlockSpec((None, bq, D), lambda b, qi: (b, qi, 0))
        kT_spec = pl.BlockSpec((None, D, Lk), lambda b, qi: (b, 0, 0))
        v_spec = pl.BlockSpec((None, Lk, Dv), lambda b, qi: (b, 0, 0))
        out_spec = pl.BlockSpec((None, bq, Dv), lambda b, qi: (b, qi, 0))
        attn_spec = pl.BlockSpec((None, bq, Lk), lambda b, qi: (b, qi, 0))

        out_shape = (
            jax.ShapeDtypeStruct((B, Lq, Dv), q.dtype),
            jax.ShapeDtypeStruct((B, Lq, Lk), q.dtype),  # attn in input dtype
        )
        cparams = pltpu.CompilerParams(
            dimension_semantics=("parallel", "parallel"),
            vmem_limit_bytes=int(vmem_limit))

        if mask_i8 is None:
            in_specs = [q_spec, kT_spec, v_spec]
            args = (q, kT, v)
            kernel = functools.partial(_sdpa_kernel, factor=factor)
            mask_bytes = 0
        else:
            mb = mask_batched
            if is_key_mask:
                mask_spec = pl.BlockSpec(
                    (None, 1, Lk), lambda b, qi: ((b if mb else 0), 0, 0))
            else:
                mask_spec = pl.BlockSpec(
                    (None, bq, Lk), lambda b, qi: ((b if mb else 0), qi, 0))
            in_specs = [q_spec, kT_spec, v_spec, mask_spec]
            args = (q, kT, v, mask_i8)
            kernel = functools.partial(_sdpa_mask_kernel, factor=factor)
            mask_bytes = int(mask_i8.size)

        cost = _cost(B, Lq, Lk, D, Dv, q, k, v, mask_bytes,
                     attn_bytes=B * Lq * Lk * itemsize,
                     out_bytes=B * Lq * Dv * itemsize)

        out, attn = pl.pallas_call(
            kernel,
            out_shape=out_shape,
            grid_spec=pltpu.PrefetchScalarGridSpec(
                num_scalar_prefetch=0,
                grid=grid,
                in_specs=in_specs,
                out_specs=[out_spec, attn_spec],
            ),
            compiler_params=cparams,
            cost_estimate=cost,
        )(*args)
        return out, attn

    # ---- return_attn=False: kv-tiled online softmax, no attn writeback ----
    bq = Lq if Lq <= 256 else 256
    if B * pl.cdiv(Lq, bq) < 2 and Lq >= 16:             # keep both v7x cores busy
        bq = min(bq, (((Lq + 1) // 2 + 7) // 8) * 8)
    bk = Lk if Lk <= 512 else 512                        # multiple of 128 when tiled
    nq, nk = pl.cdiv(Lq, bq), pl.cdiv(Lk, bk)
    grid = (B, nq, nk)

    q_spec = pl.BlockSpec((None, bq, D), lambda b, qi, ki: (b, qi, 0))
    kT_spec = pl.BlockSpec((None, D, bk), lambda b, qi, ki: (b, 0, ki))
    v_spec = pl.BlockSpec((None, bk, Dv), lambda b, qi, ki: (b, ki, 0))
    out_spec = pl.BlockSpec((None, bq, Dv), lambda b, qi, ki: (b, qi, 0))
    scratch = [pltpu.VMEM((bq, 1), jnp.float32),         # running max
               pltpu.VMEM((bq, 1), jnp.float32),         # running denom
               pltpu.VMEM((bq, Dv), jnp.float32)]        # PV accumulator
    cparams = pltpu.CompilerParams(
        dimension_semantics=("parallel", "parallel", "arbitrary"),
        vmem_limit_bytes=int(vmem_limit))

    if mask_i8 is None:
        in_specs = [q_spec, kT_spec, v_spec]
        args = (q, kT, v)
        kernel = functools.partial(_flash_kernel, factor=factor, bk=bk, kv_len=Lk)
        mask_bytes = 0
    else:
        mb = mask_batched
        if is_key_mask:
            mask_spec = pl.BlockSpec(
                (None, 1, bk), lambda b, qi, ki: ((b if mb else 0), 0, ki))
        else:
            mask_spec = pl.BlockSpec(
                (None, bq, bk), lambda b, qi, ki: ((b if mb else 0), qi, ki))
        in_specs = [q_spec, kT_spec, v_spec, mask_spec]
        args = (q, kT, v, mask_i8)
        kernel = functools.partial(_flash_mask_kernel, factor=factor, bk=bk, kv_len=Lk)
        mask_bytes = int(mask_i8.size)

    cost = _cost(B, Lq, Lk, D, Dv, q, k, v, mask_bytes,
                 attn_bytes=0, out_bytes=B * Lq * Dv * itemsize)

    out = pl.pallas_call(
        kernel,
        out_shape=jax.ShapeDtypeStruct((B, Lq, Dv), q.dtype),
        grid_spec=pltpu.PrefetchScalarGridSpec(
            num_scalar_prefetch=0,
            grid=grid,
            in_specs=in_specs,
            out_specs=out_spec,
            scratch_shapes=scratch,
        ),
        compiler_params=cparams,
        cost_estimate=cost,
    )(*args)
    return out, None


# --------------------------------------------------------------------------- #
# Self-test
# --------------------------------------------------------------------------- #
def _reference(q, k, v, mask=None, scale=True):
    s = jnp.einsum("bqd,bkd->bqk", q.astype(jnp.float32), k.astype(jnp.float32))
    if scale:
        s = s / jnp.sqrt(jnp.float32(k.shape[-1]))
    if mask is not None:
        if mask.ndim == 2:
            mask = mask[:, None, :]
        s = jnp.where(mask, -1.0e9, s)
    attn = jax.nn.softmax(s, axis=-1)
    out = jnp.einsum("bqk,bkd->bqd", attn, v.astype(jnp.float32))
    return out, attn


if __name__ == "__main__":
    key = jax.random.PRNGKey(0)
    kq, kk, kv, km, kp = jax.random.split(key, 5)

    B, Lq, Lk, D, Dv = 2, 8, 8, 32, 32
    q = jax.random.normal(kq, (B, Lq, D), dtype=jnp.float32)
    k = jax.random.normal(kk, (B, Lk, D), dtype=jnp.float32)
    v = jax.random.normal(kv, (B, Lk, Dv), dtype=jnp.float32)
    full_mask = jax.random.bernoulli(km, 0.2, (B, Lq, Lk))
    key_mask = jax.random.bernoulli(kp, 0.2, (B, Lk))

    # 1) no mask, attn returned (module semantics)
    out, attn = scaled_dot_product_attention(q, k, v)
    jax.block_until_ready((out, attn))
    r_out, r_attn = _reference(q, k, v)
    assert jnp.allclose(out, r_out, atol=1e-4), "output mismatch (no mask)"
    assert jnp.allclose(attn, r_attn, atol=1e-4), "attn mismatch (no mask)"

    # 2) dense per-(q,k) mask
    out_m, attn_m = scaled_dot_product_attention(q, k, v, mask=full_mask)
    jax.block_until_ready((out_m, attn_m))
    r_out_m, r_attn_m = _reference(q, k, v, mask=full_mask)
    assert jnp.allclose(out_m, r_out_m, atol=1e-4), "output mismatch (dense mask)"
    assert jnp.allclose(attn_m, r_attn_m, atol=1e-4), "attn mismatch (dense mask)"

    # 3) key-padding mask (broadcast in-kernel, no dense mask stream)
    out_k, attn_k = scaled_dot_product_attention(q, k, v, mask=key_mask)
    jax.block_until_ready((out_k, attn_k))
    r_out_k, r_attn_k = _reference(q, k, v, mask=key_mask)
    assert jnp.allclose(out_k, r_out_k, atol=1e-4), "output mismatch (key mask)"
    assert jnp.allclose(attn_k, r_attn_k, atol=1e-4), "attn mismatch (key mask)"

    # 4) flash path (no attn writeback), masked
    out_f, attn_f = scaled_dot_product_attention(q, k, v, mask=key_mask,
                                                 return_attn=False)
    jax.block_until_ready(out_f)
    assert attn_f is None
    assert jnp.allclose(out_f, r_out_k, atol=1e-4), "output mismatch (flash)"

    # 5) flash path, no mask, scale=False
    out_f2, _ = scaled_dot_product_attention(q, k, v, scale=False, return_attn=False)
    jax.block_until_ready(out_f2)
    r_out2, _ = _reference(q, k, v, scale=False)
    assert jnp.allclose(out_f2, r_out2, atol=1e-4), "output mismatch (flash, no scale)"

    print("KERNEL_OK")
</pallas_src>

<mosaic_0001>
module attributes {stable_mosaic.version = 11 : i64} {
  func.func @_sdpa_kernel(%arg0: i32, %arg1: i32, %arg2: memref<1x8x32xf32, #tpu.memory_space<vmem>>, %arg3: memref<1x32x8xf32, #tpu.memory_space<vmem>>, %arg4: memref<1x8x32xf32, #tpu.memory_space<vmem>>, %arg5: memref<1x8x32xf32, #tpu.memory_space<vmem>>, %arg6: memref<1x8x8xf32, #tpu.memory_space<vmem>>) attributes {dimension_semantics = [#tpu.dimension_semantics<parallel>, #tpu.dimension_semantics<parallel>], iteration_bounds = array<i64: 2, 1>, scalar_prefetch = 0 : i64, scratch_operands = 0 : i64, tpu.core_type = #tpu.core_type<tc>, window_params = [{transform_indices = @transform_0, window_bounds = array<i64: 1, 8, 32>}, {transform_indices = @transform_1, window_bounds = array<i64: 1, 32, 8>}, {transform_indices = @transform_2, window_bounds = array<i64: 1, 8, 32>}, {transform_indices = @transform_3, window_bounds = array<i64: 1, 8, 32>}, {transform_indices = @transform_4, window_bounds = array<i64: 1, 8, 8>}]} {
    %c0 = arith.constant 0 : index
    %c0_0 = arith.constant 0 : index
    %c0_1 = arith.constant 0 : index
    %0 = vector.load %arg2[%c0, %c0_0, %c0_1] : memref<1x8x32xf32, #tpu.memory_space<vmem>>, vector<1x8x32xf32>
    %1 = vector.shape_cast %0 : vector<1x8x32xf32> to vector<8x32xf32>
    %c0_2 = arith.constant 0 : index
    %c0_3 = arith.constant 0 : index
    %c0_4 = arith.constant 0 : index
    %2 = vector.load %arg3[%c0_2, %c0_3, %c0_4] : memref<1x32x8xf32, #tpu.memory_space<vmem>>, vector<1x32x8xf32>
    %3 = vector.shape_cast %2 : vector<1x32x8xf32> to vector<32x8xf32>
    %cst = arith.constant 0.255034864 : f32
    %4 = vector.broadcast %cst : f32 to vector<8x32xf32>
    %5 = arith.mulf %1, %4 : vector<8x32xf32>
    %cst_5 = arith.constant dense<0.000000e+00> : vector<8x8xf32>
    %6 = tpu.matmul %5, %3, %cst_5 {dimension_numbers = #tpu.dot_dimension_numbers<[1], [0], [0], [1], [0, 0, 1, 1], [], []>} : vector<8x32xf32>, vector<32x8xf32>, vector<8x8xf32> -> vector<8x8xf32>
    %c0_6 = arith.constant 0 : index
    %c0_7 = arith.constant 0 : index
    %c0_8 = arith.constant 0 : index
    %7 = vector.load %arg4[%c0_6, %c0_7, %c0_8] : memref<1x8x32xf32, #tpu.memory_space<vmem>>, vector<1x8x32xf32>
    %8 = vector.shape_cast %7 : vector<1x8x32xf32> to vector<8x32xf32>
    %cst_9 = arith.constant dense<0xFF800000> : vector<8xf32>
    %9 = vector.multi_reduction <maximumf>, %6, %cst_9 [1] : vector<8x8xf32> to vector<8xf32>
    %10 = vector.shape_cast %9 : vector<8xf32> to vector<8x1xf32>
    %11 = vector.broadcast %10 : vector<8x1xf32> to vector<8x8xf32>
    %12 = arith.subf %6, %11 : vector<8x8xf32>
    %13 = math.exp2 %12 : vector<8x8xf32>
    %cst_10 = arith.constant dense<0.000000e+00> : vector<8xf32>
    %14 = vector.multi_reduction <add>, %13, %cst_10 [1] : vector<8x8xf32> to vector<8xf32>
    %15 = vector.shape_cast %14 : vector<8xf32> to vector<8x1xf32>
    %16 = tpu.reciprocal %15 : vector<8x1xf32> -> vector<8x1xf32>
    %17 = vector.broadcast %16 : vector<8x1xf32> to vector<8x8xf32>
    %18 = arith.mulf %13, %17 : vector<8x8xf32>
    %c0_11 = arith.constant 0 : index
    %c0_12 = arith.constant 0 : index
    %c0_13 = arith.constant 0 : index
    %19 = vector.load %arg6[%c0_11, %c0_12, %c0_13] : memref<1x8x8xf32, #tpu.memory_space<vmem>>, vector<1x8x8xf32>
    %20 = vector.shape_cast %19 : vector<1x8x8xf32> to vector<8x8xf32>
    %21 = vector.shape_cast %18 : vector<8x8xf32> to vector<1x8x8xf32>
    tpu.vector_store %arg6[%c0_11, %c0_12, %c0_13], %21 {strides = array<i32>} : memref<1x8x8xf32, #tpu.memory_space<vmem>>, vector<1x8x8xf32>,
    %cst_14 = arith.constant dense<0.000000e+00> : vector<8x32xf32>
    %22 = tpu.matmul %18, %8, %cst_14 {dimension_numbers = #tpu.dot_dimension_numbers<[1], [0], [0], [1], [0, 0, 1, 1], [], []>} : vector<8x8xf32>, vector<8x32xf32>, vector<8x32xf32> -> vector<8x32xf32>
    %c0_15 = arith.constant 0 : index
    %c0_16 = arith.constant 0 : index
    %c0_17 = arith.constant 0 : index
    %23 = vector.load %arg5[%c0_15, %c0_16, %c0_17] : memref<1x8x32xf32, #tpu.memory_space<vmem>>, vector<1x8x32xf32>
    %24 = vector.shape_cast %23 : vector<1x8x32xf32> to vector<8x32xf32>
    %25 = vector.shape_cast %22 : vector<8x32xf32> to vector<1x8x32xf32>
    tpu.vector_store %arg5[%c0_15, %c0_16, %c0_17], %25 {strides = array<i32>} : memref<1x8x32xf32, #tpu.memory_space<vmem>>, vector<1x8x32xf32>,
    return
  }
  func.func @transform_0(%arg0: i32, %arg1: i32) -> (i32, i32, i32) {
    %c0_i32 = arith.constant 0 : i32
    %c0_i32_0 = arith.constant 0 : i32
    return %arg0, %arg1, %c0_i32 : i32, i32, i32
  }
  func.func @transform_1(%arg0: i32, %arg1: i32) -> (i32, i32, i32) {
    %c0_i32 = arith.constant 0 : i32
    %c0_i32_0 = arith.constant 0 : i32
    %c0_i32_1 = arith.constant 0 : i32
    return %arg0, %c0_i32, %c0_i32_0 : i32, i32, i32
  }
  func.func @transform_2(%arg0: i32, %arg1: i32) -> (i32, i32, i32) {
    %c0_i32 = arith.constant 0 : i32
    %c0_i32_0 = arith.constant 0 : i32
    %c0_i32_1 = arith.constant 0 : i32
    return %arg0, %c0_i32, %c0_i32_0 : i32, i32, i32
  }
  func.func @transform_3(%arg0: i32, %arg1: i32) -> (i32, i32, i32) {
    %c0_i32 = arith.constant 0 : i32
    %c0_i32_0 = arith.constant 0 : i32
    return %arg0, %arg1, %c0_i32 : i32, i32, i32
  }
  func.func @transform_4(%arg0: i32, %arg1: i32) -> (i32, i32, i32) {
    %c0_i32 = arith.constant 0 : i32
    %c0_i32_0 = arith.constant 0 : i32
    return %arg0, %arg1, %c0_i32 : i32, i32, i32
  }
}

</mosaic_0001>

<llo_original>
// kernel: tpu_custom_call.1
$region0: #{tpu_custom_call.1}
  #allocation0 [shape = 'u32[]', space=smem, size = 0x4, offset = 0x4, fixed_abs, tag = 'smem constant byte address 0x4 - core index']
  #allocation1 [shape = 'u32[144,128]{1,0:T(1,128)}', space=vmem, size = 0x12000, scoped, tag = 'internal scratch']
  %s0 = inlined_call_operand.vmem [shape: f32[2,8,32], index: 0, kind: input, shape index: {}]
  %s1 = inlined_call_operand.vmem [shape: f32[2,32,8], index: 1, kind: input, shape index: {}]
  %s2 = inlined_call_operand.vmem [shape: f32[2,8,32], index: 2, kind: input, shape index: {}]
  %s3 = inlined_call_operand.hbm [shape: f32[2,8,32], index: 3, kind: output, shape index: {0}]
  %s4 = inlined_call_operand.hbm [shape: f32[2,8,8], index: 4, kind: output, shape index: {1}]
  %5 = xla_tuple %s3, %s4
  %s6 = sld [smem:[#allocation0]]
  $region53: #{tpu_custom_call.1} parent=0
    _
  %s8 = ssub.s32 1, %s6
  %s9 = scalar_select 0, %s8, %s6
  $region1: #{tpu_custom_call.1} parent=0
    #allocation2 [shape = 'u8[8192]{0}', space=vmem, size = 0x2000, scoped, tag = 'output window, operand 0']
    #allocation3 [shape = 's32[2]{0}', space=sflag, size = 0x8, scoped, tag = 'scoped memory for tpu_custom_call.1']
    #allocation4 [shape = 'u8[8192]{0}', space=vmem, size = 0x2000, scoped, tag = 'output window, operand 1']
    #allocation5 [shape = 's32[2]{0}', space=sflag, size = 0x8, scoped, tag = 'scoped memory for tpu_custom_call.1']
    %10 = vsyncpa [#allocation3], 0
    %s11 = scalar_lea.sflag [#allocation3], 1
    %12 = vsyncpa %s11, 0
    %13 = vsyncpa [#allocation5], 0
    %s14 = scalar_lea.sflag [#allocation5], 1
    %15 = vsyncpa %s14, 0
    loop: start=0, step=1, limit=4
    $region2: #{tpu_custom_call.1} parent=1 // loop_pre_header
      _
    $region3: #{tpu_custom_call.1} parent=1 // loop_header
      %s17 = sphi 0, %s21
      %p18 = scmp.ge.s32.totalorder %s17, 4
      %s24 = sphi 0, %s36
      %s25 = sphi 0, %s32
      %s26 = sphi 0, %s24
      %s27 = sphi 0, %s25
      %s28 = sphi 0, %s26
      %s29 = sphi 0, %s27
      %s41 = sphi 0, %s43
      %s44 = sphi 0, %s41
      %s45 = sphi 0, %s44
      %s61 = sphi 0, %s45
      %s67 = sphi 0, %s69
      %s70 = sphi 0, %s67
      %s71 = sphi 0, %s70
      %s87 = sphi 0, %s71
      %s93 = sphi 0, %s95
      %s96 = sphi 0, %s93
      %s97 = sphi 0, %s96
      %s113 = sphi 0, %s97
      %s121 = sphi 0, %s123
      %s124 = sphi 0, %s121
      %s125 = sphi 0, %s124
      %s141 = sphi 0, %s125
      %s149 = sphi 0, %s151
      %s152 = sphi 0, %s149
      %s153 = sphi 0, %s152
      %s169 = sphi 0, %s153
    $region4: #{tpu_custom_call.1} parent=1 // loop_header_branch
      %20 = sbr.rel (%p18) target = $region8
    $region5: #{tpu_custom_call.1} parent=1 // loop_body
      %s22 = ssub.s32 %s17, 1
      %s23 = ssub.s32 %s17, 2
      %s30 = sadd.s32 1, %s25
      %p31 = scmp.ge.s32.totalorder %s30, 1
      %s32 = scalar_select %p31, 0, %s30
      %s33 = sadd.s32 1, %s24
      %s34 = scalar_select %p31, %s33, %s24
      %p35 = scmp.ge.s32.totalorder %s34, 2
      %s36 = scalar_select %p35, 0, %s34
      %s37 = ssub.s32 %s24, %s36
      %s38 = ssub.s32 %s25, %s32
      %s39 = sor.u32 %s37, %s38
      %p40 = scmp.eq.s32.totalorder %s39, 0
      %s42 = sadd.s32 %s41, 1
      %s43 = scalar_select %p40, %s41, %s42
      %p46 = pneg %p40
      %p47 = scmp.eq.s32.totalorder %s17, 1
      %p48 = por %p46, %p47
      %p49 = scmp.ne.s32.totalorder %s41, %s44
      %p50 = scmp.eq.s32.totalorder %s17, 0
      %p51 = por %p49, %p50
      %p52 = scmp.ne.s32.totalorder %s41, %s44
      %p53 = scmp.eq.s32.totalorder %s22, 1
      %p54 = por %p52, %p53
      %p55 = scmp.ne.s32.totalorder %s44, %s45
      %p56 = scmp.eq.s32.totalorder %s22, 0
      %p57 = por %p55, %p56
      %p58 = scmp.ne.s32.totalorder %s44, %s45
      %p59 = scmp.eq.s32.totalorder %s23, 1
      %p60 = por %p58, %p59
      %p62 = scmp.ne.s32.totalorder %s45, %s61
      %p63 = scmp.eq.s32.totalorder %s23, 0
      %p64 = por %p62, %p63
      %s65 = ssub.s32 %s24, %s36
      %p66 = scmp.eq.s32.totalorder %s65, 0
      %s68 = sadd.s32 %s67, 1
      %s69 = scalar_select %p66, %s67, %s68
      %p72 = pneg %p66
      %p73 = scmp.eq.s32.totalorder %s17, 1
      %p74 = por %p72, %p73
      %p75 = scmp.ne.s32.totalorder %s67, %s70
      %p76 = scmp.eq.s32.totalorder %s17, 0
      %p77 = por %p75, %p76
      %p78 = scmp.ne.s32.totalorder %s67, %s70
      %p79 = scmp.eq.s32.totalorder %s22, 1
      %p80 = por %p78, %p79
      %p81 = scmp.ne.s32.totalorder %s70, %s71
      %p82 = scmp.eq.s32.totalorder %s22, 0
      %p83 = por %p81, %p82
      %p84 = scmp.ne.s32.totalorder %s70, %s71
      %p85 = scmp.eq.s32.totalorder %s23, 1
      %p86 = por %p84, %p85
      %p88 = scmp.ne.s32.totalorder %s71, %s87
      %p89 = scmp.eq.s32.totalorder %s23, 0
      %p90 = por %p88, %p89
      %s91 = ssub.s32 %s24, %s36
      %p92 = scmp.eq.s32.totalorder %s91, 0
      %s94 = sadd.s32 %s93, 1
      %s95 = scalar_select %p92, %s93, %s94
      %p98 = pneg %p92
      %p99 = scmp.eq.s32.totalorder %s17, 1
      %p100 = por %p98, %p99
      %p101 = scmp.ne.s32.totalorder %s93, %s96
      %p102 = scmp.eq.s32.totalorder %s17, 0
      %p103 = por %p101, %p102
      %p104 = scmp.ne.s32.totalorder %s93, %s96
      %p105 = scmp.eq.s32.totalorder %s22, 1
      %p106 = por %p104, %p105
      %p107 = scmp.ne.s32.totalorder %s96, %s97
      %p108 = scmp.eq.s32.totalorder %s22, 0
      %p109 = por %p107, %p108
      %p110 = scmp.ne.s32.totalorder %s96, %s97
      %p111 = scmp.eq.s32.totalorder %s23, 1
      %p112 = por %p110, %p111
      %p114 = scmp.ne.s32.totalorder %s97, %s113
      %p115 = scmp.eq.s32.totalorder %s23, 0
      %p116 = por %p114, %p115
      %s117 = ssub.s32 %s24, %s36
      %s118 = ssub.s32 %s25, %s32
      %s119 = sor.u32 %s117, %s118
      %p120 = scmp.eq.s32.totalorder %s119, 0
      %s122 = sadd.s32 %s121, 1
      %s123 = scalar_select %p120, %s121, %s122
      %p126 = pneg %p120
      %p127 = scmp.eq.s32.totalorder %s17, 1
      %p128 = por %p126, %p127
      %p129 = scmp.ne.s32.totalorder %s121, %s124
      %p130 = scmp.eq.s32.totalorder %s17, 0
      %p131 = por %p129, %p130
      %p132 = scmp.ne.s32.totalorder %s121, %s124
      %p133 = scmp.eq.s32.totalorder %s22, 1
      %p134 = por %p132, %p133
      %p135 = scmp.ne.s32.totalorder %s124, %s125
      %p136 = scmp.eq.s32.totalorder %s22, 0
      %p137 = por %p135, %p136
      %p138 = scmp.ne.s32.totalorder %s124, %s125
      %p139 = scmp.eq.s32.totalorder %s23, 1
      %p140 = por %p138, %p139
      %p142 = scmp.ne.s32.totalorder %s125, %s141
      %p143 = scmp.eq.s32.totalorder %s23, 0
      %p144 = por %p142, %p143
      %s145 = ssub.s32 %s24, %s36
      %s146 = ssub.s32 %s25, %s32
      %s147 = sor.u32 %s145, %s146
      %p148 = scmp.eq.s32.totalorder %s147, 0
      %s150 = sadd.s32 %s149, 1
      %s151 = scalar_select %p148, %s149, %s150
      %p154 = pneg %p148
      %p155 = scmp.eq.s32.totalorder %s17, 1
      %p156 = por %p154, %p155
      %p157 = scmp.ne.s32.totalorder %s149, %s152
      %p158 = scmp.eq.s32.totalorder %s17, 0
      %p159 = por %p157, %p158
      %p160 = scmp.ne.s32.totalorder %s149, %s152
      %p161 = scmp.eq.s32.totalorder %s22, 1
      %p162 = por %p160, %p161
      %p163 = scmp.ne.s32.totalorder %s152, %s153
      %p164 = scmp.eq.s32.totalorder %s22, 0
      %p165 = por %p163, %p164
      %p166 = scmp.ne.s32.totalorder %s152, %s153
      %p167 = scmp.eq.s32.totalorder %s23, 1
      %p168 = por %p166, %p167
      %p170 = scmp.ne.s32.totalorder %s153, %s169
      %p171 = scmp.eq.s32.totalorder %s23, 0
      %p172 = por %p170, %p171
      %p173 = scmp.le.s32.totalorder 1, %s17
      %p174 = scmp.lt.s32.totalorder %s17, 3
      %p175 = pnand %p173, %p174
      %p176 = pneg %p175
      // Predicated region
      $region9: #{tpu_custom_call.1} parent=5 // pred_check
        _
      $region10: #{tpu_custom_call.1} parent=5 // pred_check_branch
        %178 = sbr.rel (%p175) target = $region12
      $region11: #{tpu_custom_call.1} parent=5 // pred_region
        %s179 = ssub.s32 %s17, 1
      $region12: #{tpu_custom_call.1} parent=5 // pred_fallthru
        _
      %p180 = scmp.lt.s32.totalorder %s17, 2
      // Predicated region
      $region13: #{tpu_custom_call.1} parent=5 // pred_check
        %p181 = pneg %p180
      $region14: #{tpu_custom_call.1} parent=5 // pred_check_branch
        %183 = sbr.rel (%p181) target = $region16
      $region15: #{tpu_custom_call.1} parent=5 // pred_region
        // Predicated region
        $region17: #{tpu_custom_call.1} parent=15 // pred_check
          %p184 = pneg %p51
        $region18: #{tpu_custom_call.1} parent=15 // pred_check_branch
          %186 = sbr.rel (%p184) target = $region20
        $region19: #{tpu_custom_call.1} parent=15 // pred_region
          %p187 = scmp.lt.s32.totalorder %s24, 1
          %s188 = scalar_select %p187, %s24, 1
          %p189 = scmp.lt.s32.totalorder %s25, 0
          %s190 = scalar_select %p189, %s25, 0
          %s191 = sadd.s32 %s190, %s188
          %s192 = smul.addr %s191, 8
          %s193 = scalar_lea.vmem %s0, %s192
        $region20: #{tpu_custom_call.1} parent=15 // pred_fallthru
          _
        // Predicated region
        $region21: #{tpu_custom_call.1} parent=15 // pred_check
          %p194 = pneg %p77
        $region22: #{tpu_custom_call.1} parent=15 // pred_check_branch
          %196 = sbr.rel (%p194) target = $region24
        $region23: #{tpu_custom_call.1} parent=15 // pred_region
          %p197 = scmp.lt.s32.totalorder %s24, 1
          %s198 = scalar_select %p197, %s24, 1
          %s199 = smul.addr %s198, 4
          %s200 = smul.addr %s199, 8
          %s201 = scalar_lea.vmem %s1, %s200
        $region24: #{tpu_custom_call.1} parent=15 // pred_fallthru
          _
        // Predicated region
        $region25: #{tpu_custom_call.1} parent=15 // pred_check
          %p202 = pneg %p103
        $region26: #{tpu_custom_call.1} parent=15 // pred_check_branch
          %204 = sbr.rel (%p202) target = $region28
        $region27: #{tpu_custom_call.1} parent=15 // pred_region
          %p205 = scmp.lt.s32.totalorder %s24, 1
          %s206 = scalar_select %p205, %s24, 1
          %s207 = smul.addr %s206, 8
          %s208 = scalar_lea.vmem %s2, %s207
        $region28: #{tpu_custom_call.1} parent=15 // pred_fallthru
          _
      $region16: #{tpu_custom_call.1} parent=5 // pred_fallthru
        _
      %p209 = scmp.le.s32.totalorder 1, %s17
      %p210 = scmp.lt.s32.totalorder %s17, 3
      %p211 = pnand %p209, %p210
      %p212 = pneg %p211
      // Predicated region
      $region29: #{tpu_custom_call.1} parent=5 // pred_check
        _
      $region30: #{tpu_custom_call.1} parent=5 // pred_check_branch
        %214 = sbr.rel (%p211) target = $region32
      $region31: #{tpu_custom_call.1} parent=5 // pred_region
        %s215 = ssub.s32 %s17, 1
        %p216 = scmp.lt.s32.totalorder %s26, 1
        %s217 = scalar_select %p216, %s26, 1
        %p218 = scmp.lt.s32.totalorder %s27, 0
        %s219 = scalar_select %p218, %s27, 0
        %s220 = sadd.s32 %s219, %s217
        %s221 = smul.addr %s220, 8
        %s222 = scalar_lea.vmem %s0, %s221
        %p223 = pneg %p57
        %p224 = pneg %p54
        %p225 = scmp.lt.s32.totalorder %s26, 1
        %s226 = scalar_select %p225, %s26, 1
        %s227 = smul.addr %s226, 4
        %s228 = smul.addr %s227, 8
        %s229 = scalar_lea.vmem %s1, %s228
        %p230 = pneg %p83
        %p231 = pneg %p80
        %p232 = scmp.lt.s32.totalorder %s26, 1
        %s233 = scalar_select %p232, %s26, 1
        %s234 = smul.addr %s233, 8
        %s235 = scalar_lea.vmem %s2, %s234
        %p236 = pneg %p109
        %p237 = pneg %p106
        %p238 = pneg %p137
        %p239 = pneg %p134
        %s240 = sand.u32 %s124, 1
        %s241 = scalar_lea.sflag [#allocation3], %s240
        %s242 = sand.u32 %s124, 1
        %s243 = smul.addr %s242, 8
        %s244 = scalar_lea.vmem [#allocation2], %s243
        %p245 = pneg %p165
        %p246 = pneg %p162
        %s247 = sand.u32 %s152, 1
        %s248 = scalar_lea.sflag [#allocation5], %s247
        %s249 = sand.u32 %s152, 1
        %s250 = smul.addr %s249, 8
        %s251 = scalar_lea.vmem [#allocation4], %s250
        %p252 = scmp.lt.s32.totalorder %s26, 1
        %s253 = scalar_select %p252, %s26, 1
        %p254 = scmp.lt.s32.totalorder %s27, 0
        %s255 = scalar_select %p254, %s27, 0
        %s256 = sadd.s32 %s255, %s253
        %s257 = smul.addr %s256, 8
        %s258 = scalar_lea.vmem %s0, %s257
        %p259 = scmp.lt.s32.totalorder %s26, 1
        %s260 = scalar_select %p259, %s26, 1
        %s261 = smul.addr %s260, 4
        %s262 = smul.addr %s261, 8
        %s263 = scalar_lea.vmem %s1, %s262
        %p264 = scmp.lt.s32.totalorder %s26, 1
        %s265 = scalar_select %p264, %s26, 1
        %s266 = smul.addr %s265, 8
        %s267 = scalar_lea.vmem %s2, %s266
        %v268 = vld [vmem:[%s258] sm:$0xff]
        %v269 = vld [vmem:[%s263] sm:$0xff]
        %v270 = vld [vmem:[%s263 + $0x8] sm:$0xff]
        %v271 = vld [vmem:[%s263 + $0x10] sm:$0xff]
        %v272 = vld [vmem:[%s263 + $0x18] sm:$0xff]
        %v273 = vmul.f32 %v268, 0.25503486
        %vm274 = vcmask 261120
        %v276 = vsel %vm274, %v273, 0
        %278 = vmatprep.subr.mxu0 0.0
        %279 = vmatpush1.msra.mxu0 0.0
        %280 = vmatprep.subr.mxu0 0.0
        %281 = vmatpush1.msra.mxu0 0.0
        %282 = vmatprep.subr.mxu0 0.0
        %283 = vmatpush1.msra.mxu0 0.0
        %284 = vmatprep.subr.mxu0 0.0
        %285 = vmatpush1.msra.mxu0 0.0
        %286 = vmatprep.subr.mxu0 0.0
        %287 = vmatpush1.msra.mxu0 0.0
        %288 = vmatprep.subr.mxu0 0.0
        %289 = vmatpush1.msra.mxu0 0.0
        %290 = vmatprep.subr.mxu0 0.0
        %291 = vmatpush1.msra.mxu0 0.0
        %292 = vmatprep.subr.mxu0 0.0
        %293 = vmatpush1.msra.mxu0 0.0
        %294 = vmatprep.subr.mxu0 0.0
        %295 = vmatpush1.msra.mxu0 0.0
        %296 = vmatprep.subr.mxu0 0.0
        %297 = vmatpush1.msra.mxu0 0.0
        %298 = vmatprep.subr.mxu0 0.0
        %299 = vmatpush1.msra.mxu0 0.0
        %300 = vmatprep.subr.mxu0 0.0
        %301 = vmatpush1.msra.mxu0 0.0
        %302 = vmatprep.subr.mxu0 0.0
        %303 = vmatpush1.msra.mxu0 %v272
        %304 = vmatprep.subr.mxu0 0.0
        %305 = vmatpush1.msra.mxu0 %v271
        %306 = vmatprep.subr.mxu0 0.0
        %307 = vmatpush1.msra.mxu0 %v270
        %308 = vmatprep.subr.mxu0 0.0
        %309 = vmatpush1.msra.mxu0 %v269
        %310 = vmatprep.subr.mxu0 0.0
        %311 = vmatpush2.msra.mxu0 0.0
        %312 = vmatprep.subr.mxu0 0.0
        %313 = vmatpush2.msra.mxu0 0.0
        %314 = vmatprep.subr.mxu0 0.0
        %315 = vmatpush2.msra.mxu0 0.0
        %316 = vmatprep.subr.mxu0 0.0
        %317 = vmatpush2.msra.mxu0 0.0
        %318 = vmatprep.subr.mxu0 0.0
        %319 = vmatpush2.msra.mxu0 0.0
        %320 = vmatprep.subr.mxu0 0.0
        %321 = vmatpush2.msra.mxu0 0.0
        %322 = vmatprep.subr.mxu0 0.0
        %323 = vmatpush2.msra.mxu0 0.0
        %324 = vmatprep.subr.mxu0 0.0
        %325 = vmatpush2.msra.mxu0 0.0
        %326 = vmatprep.subr.mxu0 0.0
        %327 = vmatpush2.msra.mxu0 0.0
        %328 = vmatprep.subr.mxu0 0.0
        %329 = vmatpush2.msra.mxu0 0.0
        %330 = vmatprep.subr.mxu0 0.0
        %331 = vmatpush2.msra.mxu0 0.0
        %332 = vmatprep.subr.mxu0 0.0
        %333 = vmatpush2.msra.mxu0 0.0
        %334 = vmatprep.subr.mxu0 0.0
        %335 = vmatpush2.msra.mxu0 0.0
        %336 = vmatprep.subr.mxu0 0.0
        %337 = vmatpush2.msra.mxu0 0.0
        %338 = vmatprep.subr.mxu0 0.0
        %339 = vmatpush2.msra.mxu0 0.0
        %340 = vmatprep.subr.mxu0 0.0
        %341 = vmatpush2.msra.mxu0 0.0
        %342 = vmatprep.mubr.f32.mxu0 0.0
        %343 = vmatmul.mubr.f32.gmra.mxu0 %v276
        %v344 = vpop.f32.mrf.mxu0
        %v345 = vadd.f32 0.0, %v344
        %v346 = vpop.f32.mrf.mxu0
        %347 = vdwg.mxu0
        %v348 = vld [vmem:[%s267] sm:$0xff]
        %vm349 = vcmask 64512
        %v350 = vsel %vm349, %v345, -inf
        %351 = vmax.xlane.f32.xlu0 %v350
        %v352 = vpop.xlane.xlu0 %351
        %v353 = vsub.f32 %v345, %v352
        %v354 = vpow.pop %v353
        %v355 = vsel %vm349, %v354, 0.0
        %356 = vadd.xlane.f32.xlu0 %v355
        %v357 = vpop.xlane.xlu0 %356
        %v358 = vrcp.pop %v357
        %v359 = vmul.f32 %v354, %v358
        %360 = vst.msk [vmem:[%s251] sm:$0xff] %vm349, %v359
        %v362 = vsel %vm349, %v359, 0
        %364 = vmatprep.subr.mxu0 0.0
        %365 = vmatpush1.msra.mxu0 0.0
        %366 = vmatprep.subr.mxu0 0.0
        %367 = vmatpush1.msra.mxu0 0.0
        %368 = vmatprep.subr.mxu0 0.0
        %369 = vmatpush1.msra.mxu0 0.0
        %370 = vmatprep.subr.mxu0 0.0
        %371 = vmatpush1.msra.mxu0 0.0
        %372 = vmatprep.subr.mxu0 0.0
        %373 = vmatpush1.msra.mxu0 0.0
        %374 = vmatprep.subr.mxu0 0.0
        %375 = vmatpush1.msra.mxu0 0.0
        %376 = vmatprep.subr.mxu0 0.0
        %377 = vmatpush1.msra.mxu0 0.0
        %378 = vmatprep.subr.mxu0 0.0
        %379 = vmatpush1.msra.mxu0 0.0
        %380 = vmatprep.subr.mxu0 0.0
        %381 = vmatpush1.msra.mxu0 0.0
        %382 = vmatprep.subr.mxu0 0.0
        %383 = vmatpush1.msra.mxu0 0.0
        %384 = vmatprep.subr.mxu0 0.0
        %385 = vmatpush1.msra.mxu0 0.0
        %386 = vmatprep.subr.mxu0 0.0
        %387 = vmatpush1.msra.mxu0 0.0
        %388 = vmatprep.subr.mxu0 0.0
        %389 = vmatpush1.msra.mxu0 0.0
        %390 = vmatprep.subr.mxu0 0.0
        %391 = vmatpush1.msra.mxu0 0.0
        %392 = vmatprep.subr.mxu0 0.0
        %393 = vmatpush1.msra.mxu0 0.0
        %394 = vmatprep.subr.mxu0 0.0
        %395 = vmatpush1.msra.mxu0 %v348
        %396 = vmatprep.subr.mxu0 0.0
        %397 = vmatpush2.msra.mxu0 0.0
        %398 = vmatprep.subr.mxu0 0.0
        %399 = vmatpush2.msra.mxu0 0.0
        %400 = vmatprep.subr.mxu0 0.0
        %401 = vmatpush2.msra.mxu0 0.0
        %402 = vmatprep.subr.mxu0 0.0
        %403 = vmatpush2.msra.mxu0 0.0
        %404 = vmatprep.subr.mxu0 0.0
        %405 = vmatpush2.msra.mxu0 0.0
        %406 = vmatprep.subr.mxu0 0.0
        %407 = vmatpush2.msra.mxu0 0.0
        %408 = vmatprep.subr.mxu0 0.0
        %409 = vmatpush2.msra.mxu0 0.0
        %410 = vmatprep.subr.mxu0 0.0
        %411 = vmatpush2.msra.mxu0 0.0
        %412 = vmatprep.subr.mxu0 0.0
        %413 = vmatpush2.msra.mxu0 0.0
        %414 = vmatprep.subr.mxu0 0.0
        %415 = vmatpush2.msra.mxu0 0.0
        %416 = vmatprep.subr.mxu0 0.0
        %417 = vmatpush2.msra.mxu0 0.0
        %418 = vmatprep.subr.mxu0 0.0
        %419 = vmatpush2.msra.mxu0 0.0
        %420 = vmatprep.subr.mxu0 0.0
        %421 = vmatpush2.msra.mxu0 0.0
        %422 = vmatprep.subr.mxu0 0.0
        %423 = vmatpush2.msra.mxu0 0.0
        %424 = vmatprep.subr.mxu0 0.0
        %425 = vmatpush2.msra.mxu0 0.0
        %426 = vmatprep.subr.mxu0 0.0
        %427 = vmatpush2.msra.mxu0 0.0
        %428 = vmatprep.mubr.f32.mxu0 0.0
        %429 = vmatmul.mubr.f32.gmra.mxu0 %v362
        %v430 = vpop.f32.mrf.mxu0
        %v431 = vadd.f32 0.0, %v430
        %v432 = vpop.f32.mrf.mxu0
        %433 = vdwg.mxu0
        %434 = vst.msk [vmem:[%s244] sm:$0xff] %vm274, %v431
        %s435 = sand.u32 %s124, 1
        %s436 = scalar_lea.sflag [#allocation3], %s435
        %s437 = sand.u32 %s124, 1
        %s438 = smul.addr %s437, 8
        %s439 = scalar_lea.vmem [#allocation2], %s438
        %s440 = sand.u32 %s152, 1
        %s441 = scalar_lea.sflag [#allocation5], %s440
        %s442 = sand.u32 %s152, 1
        %s443 = smul.addr %s442, 8
        %s444 = scalar_lea.vmem [#allocation4], %s443
        // Predicated region
        $region33: #{tpu_custom_call.1} parent=31 // pred_check
          %p445 = pneg %p134
        $region34: #{tpu_custom_call.1} parent=31 // pred_check_branch
          %447 = sbr.rel (%p445) target = $region36
        $region35: #{tpu_custom_call.1} parent=31 // pred_region
          %s449 = ssub.s32 128, 128
          %450 = vsyncadd %s436, %s449
          %s451 = sadd.s32 %s27, %s26
          %s452 = smul.addr %s451, 128
          %s453 = scalar_lea.hbm %s3, %s452
          %s455 = sshll.u32 %s439, 4
          %s456 = int_to_ptr.vmem [resolvable:$true] %s455
          %458 = dma.vmem_to_hbm [thread:$0]  %s456, 128, %s453, %s436
        $region36: #{tpu_custom_call.1} parent=31 // pred_fallthru
          _
        // Predicated region
        $region37: #{tpu_custom_call.1} parent=31 // pred_check
          %p459 = pneg %p162
        $region38: #{tpu_custom_call.1} parent=31 // pred_check_branch
          %461 = sbr.rel (%p459) target = $region40
        $region39: #{tpu_custom_call.1} parent=31 // pred_region
          %s463 = ssub.s32 128, 128
          %464 = vsyncadd %s441, %s463
          %s465 = sadd.s32 %s27, %s26
          %s466 = smul.addr %s465, 128
          %s467 = scalar_lea.hbm %s4, %s466
          %s469 = sshll.u32 %s444, 4
          %s470 = int_to_ptr.vmem [resolvable:$true] %s469
          %472 = dma.vmem_to_hbm [thread:$0]  %s470, 128, %s467, %s441
        $region40: #{tpu_custom_call.1} parent=31 // pred_fallthru
          _
      $region32: #{tpu_custom_call.1} parent=5 // pred_fallthru
        _
      %p473 = scmp.le.s32.totalorder 2, %s17
      // Predicated region
      $region41: #{tpu_custom_call.1} parent=5 // pred_check
        %p474 = pneg %p473
      $region42: #{tpu_custom_call.1} parent=5 // pred_check_branch
        %476 = sbr.rel (%p474) target = $region44
      $region43: #{tpu_custom_call.1} parent=5 // pred_region
        %s477 = ssub.s32 %s17, 2
        // Predicated region
        $region45: #{tpu_custom_call.1} parent=43 // pred_check
          %p478 = pneg %p140
        $region46: #{tpu_custom_call.1} parent=43 // pred_check_branch
          %480 = sbr.rel (%p478) target = $region48
        $region47: #{tpu_custom_call.1} parent=43 // pred_region
          %s481 = sand.u32 %s125, 1
          %s482 = scalar_lea.sflag [#allocation3], %s481
          %s483 = sand.u32 %s125, 1
          %s484 = smul.addr %s483, 8
          %s485 = scalar_lea.vmem [#allocation2], %s484
          %486 = dma.done %s482, 128
        $region48: #{tpu_custom_call.1} parent=43 // pred_fallthru
          _
        // Predicated region
        $region49: #{tpu_custom_call.1} parent=43 // pred_check
          %p487 = pneg %p168
        $region50: #{tpu_custom_call.1} parent=43 // pred_check_branch
          %489 = sbr.rel (%p487) target = $region52
        $region51: #{tpu_custom_call.1} parent=43 // pred_region
          %s490 = sand.u32 %s153, 1
          %s491 = scalar_lea.sflag [#allocation5], %s490
          %s492 = sand.u32 %s153, 1
          %s493 = smul.addr %s492, 8
          %s494 = scalar_lea.vmem [#allocation4], %s493
          %495 = dma.done %s491, 128
        $region52: #{tpu_custom_call.1} parent=43 // pred_fallthru
          _
      $region44: #{tpu_custom_call.1} parent=5 // pred_fallthru
        _
    $region6: #{tpu_custom_call.1} parent=1 // loop_footer
      %s21 = sadd.s32 1, %s17
    $region7: #{tpu_custom_call.1} parent=1 // loop_footer_branch
      %16 = sbr.rel target = $region3
    $region8: #{tpu_custom_call.1} parent=1 // loop_exit
      _
    %496 = vsyncpa [#allocation3], 1
    %s497 = scalar_lea.sflag [#allocation3], 1
    %498 = vsyncpa %s497, 1
    %499 = vsyncpa [#allocation5], 1
    %s500 = scalar_lea.sflag [#allocation5], 1
    %501 = vsyncpa %s500, 1

</llo_original>
